<compile_context>
chip_gen: v7x
topology: tpu7x:2x2x1
jax: 0.10.0
libtpu: 0.0.40
codegen_flags: <defaults>
</compile_context>

<pallas_src>
import jax
import jax.numpy as jnp
import numpy as np
from jax.experimental import pallas as pl
from jax.experimental.pallas import tpu as pltpu


# --------------------------- Pallas kernel ----------------------------------
def _partial_sums_kernel(gs_ref, ps_ref, im_ref, gg_ref, pg_ref, out_ref):
    f32 = jnp.float32

    gt = gs_ref[...].astype(f32)      # (N, T)
    pr = ps_ref[...].astype(f32)      # (N, T)
    ig = im_ref[...].astype(f32)      # (N, T)

    # ---- class-balanced cross entropy partial sums --------------------------
    # gt_score is binary for EAST, so one log per element suffices:
    #   gt==1 pixels contribute log(p), gt==0 pixels contribute log(1-p).
    # (NOTE: like the PyTorch reference, p = pred*(1-ignored) may be 0 where
    #  ignored==1 & gt==1 -> +inf loss; where gt==0 & p==0 this path yields a
    #  clean 0 instead of PyTorch's 0*(-inf)=NaN.)
    p = pr * (1.0 - ig)
    is_pos = gt > 0.5
    logsel = jnp.log(jnp.where(is_pos, p, 1.0 - p))
    s_gt = jnp.sum(gt)
    s_pos = jnp.sum(jnp.where(is_pos, logsel, 0.0))    # sum log(p)   over gt==1
    s_neg = jnp.sum(jnp.where(is_pos, 0.0, logsel))    # sum log(1-p) over gt==0

    # ---- IoU partial sum -----------------------------------------------------
    gd = gg_ref[:, 0:4, :].astype(f32)                  # (N, 4, T) distances
    pd = pg_ref[:, 0:4, :].astype(f32)
    md = jnp.minimum(gd, pd)
    inter = (md[:, 0, :] + md[:, 1, :]) * (md[:, 2, :] + md[:, 3, :])
    p_area = (pd[:, 0, :] + pd[:, 1, :]) * (pd[:, 2, :] + pd[:, 3, :])
    g_area = (gd[:, 0, :] + gd[:, 1, :]) * (gd[:, 2, :] + gd[:, 3, :])
    union = p_area + g_area - inter
    s_iou = jnp.sum(-jnp.log(inter * pl.reciprocal(union, approx=True)))

    # ---- angle partial sum ---------------------------------------------------
    dtheta = pg_ref[:, 4, :].astype(f32) - gg_ref[:, 4, :].astype(f32)
    s_ang = jnp.sum(1.0 - jnp.cos(dtheta))

    # ---- write the 5 partial sums into a lane-dense (1, 8, 128) block -------
    lane = jax.lax.broadcasted_iota(jnp.int32, out_ref.shape, dimension=2)
    out_ref[...] = (jnp.where(lane == 0, s_gt, 0.0)
                    + jnp.where(lane == 1, s_pos, 0.0)
                    + jnp.where(lane == 2, s_neg, 0.0)
                    + jnp.where(lane == 3, s_iou, 0.0)
                    + jnp.where(lane == 4, s_ang, 0.0))


def _pick_tile_hw(hw, n, vmem_budget_bytes=8 * 1024 * 1024):
    """Largest power-of-two tile (multiple of 128) dividing hw that keeps the
    double-buffered per-step input footprint under the budget."""
    # 13 f32 values per (batch, hw) element across the 5 inputs, x2 buffers.
    per_lane = 13 * n * 4 * 2
    max_lanes = max(128, vmem_budget_bytes // per_lane)
    best = hw          # full-extent block is always legal (even if unaligned)
    t = 128
    while t <= max_lanes:
        if hw % t == 0:
            best = t
        t *= 2
    return best


def east_loss_pallas(gt_score, pred_score, gt_geo, pred_geo, ignored_map,
                     weight_angle=10.0, tile_hw=None):
    N, _, H, W = gt_score.shape
    HW = H * W

    # Free reshapes only (contiguous); keep native dtypes, cast inside kernel.
    gs = gt_score.reshape(N, HW)
    ps = pred_score.reshape(N, HW)
    im = ignored_map.reshape(N, HW)
    gg = gt_geo.reshape(N, 5, HW)
    pg = pred_geo.reshape(N, 5, HW)

    T = tile_hw if tile_hw is not None else _pick_tile_hw(HW, N)
    assert HW % T == 0, f"tile_hw={T} must divide H*W={HW}"
    num_tiles = HW // T

    in_bytes = sum(int(x.size) * x.dtype.itemsize for x in (gs, ps, im, gg, pg))
    cost = pl.CostEstimate(
        flops=30 * N * HW,
        transcendentals=4 * N * HW,   # 1 log (CE) + 1 log + 1 rcp (IoU) + 1 cos
        bytes_accessed=in_bytes + num_tiles * 8 * 128 * 4,
    )

    partial = pl.pallas_call(
        _partial_sums_kernel,
        out_shape=jax.ShapeDtypeStruct((num_tiles, 8, 128), jnp.float32),
        grid=(num_tiles,),
        in_specs=[
            pl.BlockSpec((N, T), lambda t: (0, t)),
            pl.BlockSpec((N, T), lambda t: (0, t)),
            pl.BlockSpec((N, T), lambda t: (0, t)),
            pl.BlockSpec((N, 5, T), lambda t: (0, 0, t)),
            pl.BlockSpec((N, 5, T), lambda t: (0, 0, t)),
        ],
        out_specs=pl.BlockSpec((1, 8, 128), lambda t: (t, 0, 0)),
        compiler_params=pltpu.CompilerParams(
            dimension_semantics=("parallel",)),
        cost_estimate=cost,
    )(gs, ps, im, gg, pg)

    # ---- tiny finalize in plain JAX -----------------------------------------
    sums = jnp.sum(partial[:, 0, :5].astype(jnp.float32), axis=0)
    sum_gt, s_pos, s_neg, s_iou, s_ang = (sums[0], sums[1], sums[2],
                                          sums[3], sums[4])
    numel = jnp.float32(N * HW)
    beta = 1.0 - sum_gt / numel
    classify = (-beta * s_pos - (1.0 - beta) * s_neg) / numel
    iou = s_iou / numel
    angle = s_ang / numel
    total = jnp.float32(weight_angle) * angle + iou + classify

    # PyTorch early-returns 0 when sum(gt_score) < 1; zero components too.
    valid = sum_gt >= 1.0
    zero = jnp.float32(0.0)
    classify = jnp.where(valid, classify, zero)
    iou = jnp.where(valid, iou, zero)
    angle = jnp.where(valid, angle, zero)
    total = jnp.where(valid, total, zero)
    return total, (classify, angle, iou)


# -------------------- pure-JAX reference (mirrors PyTorch) --------------------
def east_loss_ref(gt_score, pred_score, gt_geo, pred_geo, ignored_map,
                  weight_angle=10.0):
    if float(jnp.sum(gt_score)) < 1:
        return jnp.float32(0.0)
    beta = 1.0 - jnp.sum(gt_score) / gt_score.size
    bs = pred_score.shape[0]
    p = (pred_score * (1.0 - ignored_map)).reshape(bs, -1)
    g = gt_score.reshape(bs, -1)
    ce = -beta * g * jnp.log(p) - (1.0 - beta) * (1.0 - g) * jnp.log(1.0 - p)
    classify = jnp.mean(ce)

    pgeo = pred_geo.reshape(bs, 5, -1).transpose(0, 2, 1)
    ggeo = gt_geo.reshape(bs, 5, -1).transpose(0, 2, 1)
    pred_d = pgeo[:, :, :4].reshape(-1, 4)
    gt_d = ggeo[:, :, :4].reshape(-1, 4)
    min_d = jnp.minimum(pred_d, gt_d)
    inter = jnp.sum(min_d[:, :2], axis=1) * jnp.sum(min_d[:, 2:], axis=1)
    pa = jnp.sum(pred_d[:, :2], axis=1) * jnp.sum(pred_d[:, 2:], axis=1)
    ga = jnp.sum(gt_d[:, :2], axis=1) * jnp.sum(gt_d[:, 2:], axis=1)
    union = pa + ga - inter
    iou = jnp.mean(-jnp.log(inter / union))
    angle = jnp.mean(1.0 - jnp.cos(pgeo[:, :, -1].reshape(-1)
                                   - ggeo[:, :, -1].reshape(-1)))
    return weight_angle * angle + iou + classify


if __name__ == "__main__":
    N, H, W = 2, 16, 16
    key = jax.random.PRNGKey(0)
    k1, k2, k3, k4, k5 = jax.random.split(key, 5)

    gt_score = jax.random.bernoulli(k1, p=0.3, shape=(N, 1, H, W)).astype(jnp.float32)
    pred_score = jax.random.uniform(k2, (N, 1, H, W), jnp.float32,
                                    minval=0.05, maxval=0.95)
    # keep ignored_map all-zero so log(pred*(1-ignored)) stays finite
    ignored_map = jnp.zeros((N, 1, H, W), jnp.float32)

    gt_d = jax.random.uniform(k3, (N, 4, H, W), jnp.float32, minval=0.5, maxval=4.0)
    gt_a = jax.random.uniform(k4, (N, 1, H, W), jnp.float32, minval=-0.5, maxval=0.5)
    gt_geo = jnp.concatenate([gt_d, gt_a], axis=1)

    pred_d = jax.random.uniform(k5, (N, 4, H, W), jnp.float32, minval=0.5, maxval=4.0)
    pred_a = jax.random.uniform(jax.random.fold_in(k5, 1), (N, 1, H, W),
                                jnp.float32, minval=-0.5, maxval=0.5)
    pred_geo = jnp.concatenate([pred_d, pred_a], axis=1)

    # tile_hw=128 -> 2 grid steps, exercising the tiled/partial-sum path.
    total, (classify, angle, iou) = east_loss_pallas(
        gt_score, pred_score, gt_geo, pred_geo, ignored_map,
        weight_angle=10.0, tile_hw=128)
    total = jax.block_until_ready(total)

    print('classify loss is {:.8f}, angle loss is {:.8f}, iou loss is {:.8f}'.format(
        float(classify), float(angle), float(iou)))

    ref = east_loss_ref(gt_score, pred_score, gt_geo, pred_geo, ignored_map, 10.0)
    np.testing.assert_allclose(float(total), float(ref), rtol=2e-2, atol=2e-3)

    # also exercise the sum(gt_score) < 1 gate
    total0, (c0, a0, i0) = east_loss_pallas(
        jnp.zeros_like(gt_score), pred_score, gt_geo, pred_geo, ignored_map,
        weight_angle=10.0, tile_hw=128)
    total0 = jax.block_until_ready(total0)
    np.testing.assert_allclose(float(total0), 0.0, atol=1e-6)
    np.testing.assert_allclose(float(c0), 0.0, atol=1e-6)

    print("KERNEL_OK")
</pallas_src>

<mosaic_0001>
module attributes {stable_mosaic.version = 11 : i64} {
  func.func @_partial_sums_kernel(%arg0: i32, %arg1: memref<2x128xf32, #tpu.memory_space<vmem>>, %arg2: memref<2x128xf32, #tpu.memory_space<vmem>>, %arg3: memref<2x128xf32, #tpu.memory_space<vmem>>, %arg4: memref<2x5x128xf32, #tpu.memory_space<vmem>>, %arg5: memref<2x5x128xf32, #tpu.memory_space<vmem>>, %arg6: memref<1x8x128xf32, #tpu.memory_space<vmem>>) attributes {dimension_semantics = [#tpu.dimension_semantics<parallel>], iteration_bounds = array<i64: 2>, scalar_prefetch = 0 : i64, scratch_operands = 0 : i64, tpu.core_type = #tpu.core_type<tc>, window_params = [{transform_indices = @transform_0, window_bounds = array<i64: 2, 128>}, {transform_indices = @transform_1, window_bounds = array<i64: 2, 128>}, {transform_indices = @transform_2, window_bounds = array<i64: 2, 128>}, {transform_indices = @transform_3, window_bounds = array<i64: 2, 5, 128>}, {transform_indices = @transform_4, window_bounds = array<i64: 2, 5, 128>}, {transform_indices = @transform_5, window_bounds = array<i64: 1, 8, 128>}]} {
    %c0 = arith.constant 0 : index
    %c0_0 = arith.constant 0 : index
    %0 = vector.load %arg1[%c0, %c0_0] : memref<2x128xf32, #tpu.memory_space<vmem>>, vector<2x128xf32>
    %c0_1 = arith.constant 0 : index
    %c0_2 = arith.constant 0 : index
    %1 = vector.load %arg2[%c0_1, %c0_2] : memref<2x128xf32, #tpu.memory_space<vmem>>, vector<2x128xf32>
    %c0_3 = arith.constant 0 : index
    %c0_4 = arith.constant 0 : index
    %2 = vector.load %arg3[%c0_3, %c0_4] : memref<2x128xf32, #tpu.memory_space<vmem>>, vector<2x128xf32>
    %cst = arith.constant 1.000000e+00 : f32
    %3 = vector.broadcast %cst : f32 to vector<2x128xf32>
    %4 = arith.subf %3, %2 : vector<2x128xf32>
    %5 = arith.mulf %1, %4 : vector<2x128xf32>
    %cst_5 = arith.constant 5.000000e-01 : f32
    %6 = vector.broadcast %cst_5 : f32 to vector<2x128xf32>
    %7 = arith.cmpf ogt, %0, %6 : vector<2x128xf32>
    %cst_6 = arith.constant 1.000000e+00 : f32
    %8 = vector.broadcast %cst_6 : f32 to vector<2x128xf32>
    %9 = arith.subf %8, %5 : vector<2x128xf32>
    %10 = arith.select %7, %5, %9 : vector<2x128xi1>, vector<2x128xf32>
    %11 = math.log %10 : vector<2x128xf32>
    %12 = vector.shape_cast %0 : vector<2x128xf32> to vector<1x2x128xf32>
    %cst_7 = arith.constant dense<0.000000e+00> : vector<1xf32>
    %13 = vector.multi_reduction <add>, %12, %cst_7 [1, 2] : vector<1x2x128xf32> to vector<1xf32>
    %14 = vector.shape_cast %13 : vector<1xf32> to vector<1x1x1xf32>
    %15 = vector.extract %14[0, 0, 0] : f32 from vector<1x1x1xf32>
    %cst_8 = arith.constant 0.000000e+00 : f32
    %16 = vector.broadcast %cst_8 : f32 to vector<2x128xf32>
    %17 = arith.select %7, %11, %16 : vector<2x128xi1>, vector<2x128xf32>
    %18 = vector.shape_cast %17 : vector<2x128xf32> to vector<1x2x128xf32>
    %cst_9 = arith.constant dense<0.000000e+00> : vector<1xf32>
    %19 = vector.multi_reduction <add>, %18, %cst_9 [1, 2] : vector<1x2x128xf32> to vector<1xf32>
    %20 = vector.shape_cast %19 : vector<1xf32> to vector<1x1x1xf32>
    %21 = vector.extract %20[0, 0, 0] : f32 from vector<1x1x1xf32>
    %cst_10 = arith.constant 0.000000e+00 : f32
    %22 = vector.broadcast %cst_10 : f32 to vector<2x128xf32>
    %23 = arith.select %7, %22, %11 : vector<2x128xi1>, vector<2x128xf32>
    %24 = vector.shape_cast %23 : vector<2x128xf32> to vector<1x2x128xf32>
    %cst_11 = arith.constant dense<0.000000e+00> : vector<1xf32>
    %25 = vector.multi_reduction <add>, %24, %cst_11 [1, 2] : vector<1x2x128xf32> to vector<1xf32>
    %26 = vector.shape_cast %25 : vector<1xf32> to vector<1x1x1xf32>
    %27 = vector.extract %26[0, 0, 0] : f32 from vector<1x1x1xf32>
    %c0_12 = arith.constant 0 : index
    %c0_13 = arith.constant 0 : index
    %c0_14 = arith.constant 0 : index
    %28 = vector.load %arg4[%c0_12, %c0_13, %c0_14] : memref<2x5x128xf32, #tpu.memory_space<vmem>>, vector<2x4x128xf32>
    %c0_15 = arith.constant 0 : index
    %c0_16 = arith.constant 0 : index
    %c0_17 = arith.constant 0 : index
    %29 = vector.load %arg5[%c0_15, %c0_16, %c0_17] : memref<2x5x128xf32, #tpu.memory_space<vmem>>, vector<2x4x128xf32>
    %30 = arith.minimumf %28, %29 : vector<2x4x128xf32>
    %31 = vector.extract_strided_slice %30 {offsets = [0, 0, 0], sizes = [2, 1, 128], strides = [1, 1, 1]} : vector<2x4x128xf32> to vector<2x1x128xf32>
    %32 = vector.shape_cast %31 : vector<2x1x128xf32> to vector<2x128xf32>
    %33 = vector.extract_strided_slice %30 {offsets = [0, 1, 0], sizes = [2, 1, 128], strides = [1, 1, 1]} : vector<2x4x128xf32> to vector<2x1x128xf32>
    %34 = vector.shape_cast %33 : vector<2x1x128xf32> to vector<2x128xf32>
    %35 = arith.addf %32, %34 : vector<2x128xf32>
    %36 = vector.extract_strided_slice %30 {offsets = [0, 2, 0], sizes = [2, 1, 128], strides = [1, 1, 1]} : vector<2x4x128xf32> to vector<2x1x128xf32>
    %37 = vector.shape_cast %36 : vector<2x1x128xf32> to vector<2x128xf32>
    %38 = vector.extract_strided_slice %30 {offsets = [0, 3, 0], sizes = [2, 1, 128], strides = [1, 1, 1]} : vector<2x4x128xf32> to vector<2x1x128xf32>
    %39 = vector.shape_cast %38 : vector<2x1x128xf32> to vector<2x128xf32>
    %40 = arith.addf %37, %39 : vector<2x128xf32>
    %41 = arith.mulf %35, %40 : vector<2x128xf32>
    %42 = vector.extract_strided_slice %29 {offsets = [0, 0, 0], sizes = [2, 1, 128], strides = [1, 1, 1]} : vector<2x4x128xf32> to vector<2x1x128xf32>
    %43 = vector.shape_cast %42 : vector<2x1x128xf32> to vector<2x128xf32>
    %44 = vector.extract_strided_slice %29 {offsets = [0, 1, 0], sizes = [2, 1, 128], strides = [1, 1, 1]} : vector<2x4x128xf32> to vector<2x1x128xf32>
    %45 = vector.shape_cast %44 : vector<2x1x128xf32> to vector<2x128xf32>
    %46 = arith.addf %43, %45 : vector<2x128xf32>
    %47 = vector.extract_strided_slice %29 {offsets = [0, 2, 0], sizes = [2, 1, 128], strides = [1, 1, 1]} : vector<2x4x128xf32> to vector<2x1x128xf32>
    %48 = vector.shape_cast %47 : vector<2x1x128xf32> to vector<2x128xf32>
    %49 = vector.extract_strided_slice %29 {offsets = [0, 3, 0], sizes = [2, 1, 128], strides = [1, 1, 1]} : vector<2x4x128xf32> to vector<2x1x128xf32>
    %50 = vector.shape_cast %49 : vector<2x1x128xf32> to vector<2x128xf32>
    %51 = arith.addf %48, %50 : vector<2x128xf32>
    %52 = arith.mulf %46, %51 : vector<2x128xf32>
    %53 = vector.extract_strided_slice %28 {offsets = [0, 0, 0], sizes = [2, 1, 128], strides = [1, 1, 1]} : vector<2x4x128xf32> to vector<2x1x128xf32>
    %54 = vector.shape_cast %53 : vector<2x1x128xf32> to vector<2x128xf32>
    %55 = vector.extract_strided_slice %28 {offsets = [0, 1, 0], sizes = [2, 1, 128], strides = [1, 1, 1]} : vector<2x4x128xf32> to vector<2x1x128xf32>
    %56 = vector.shape_cast %55 : vector<2x1x128xf32> to vector<2x128xf32>
    %57 = arith.addf %54, %56 : vector<2x128xf32>
    %58 = vector.extract_strided_slice %28 {offsets = [0, 2, 0], sizes = [2, 1, 128], strides = [1, 1, 1]} : vector<2x4x128xf32> to vector<2x1x128xf32>
    %59 = vector.shape_cast %58 : vector<2x1x128xf32> to vector<2x128xf32>
    %60 = vector.extract_strided_slice %28 {offsets = [0, 3, 0], sizes = [2, 1, 128], strides = [1, 1, 1]} : vector<2x4x128xf32> to vector<2x1x128xf32>
    %61 = vector.shape_cast %60 : vector<2x1x128xf32> to vector<2x128xf32>
    %62 = arith.addf %59, %61 : vector<2x128xf32>
    %63 = arith.mulf %57, %62 : vector<2x128xf32>
    %64 = arith.addf %52, %63 : vector<2x128xf32>
    %65 = arith.subf %64, %41 : vector<2x128xf32>
    %66 = tpu.reciprocal %65 {approx = true} : vector<2x128xf32> -> vector<2x128xf32>
    %67 = arith.mulf %41, %66 : vector<2x128xf32>
    %68 = math.log %67 : vector<2x128xf32>
    %cst_18 = arith.constant 0.000000e+00 : f32
    %69 = vector.broadcast %cst_18 : f32 to vector<2x128xf32>
    %70 = arith.subf %69, %68 : vector<2x128xf32>
    %71 = vector.shape_cast %70 : vector<2x128xf32> to vector<1x2x128xf32>
    %cst_19 = arith.constant dense<0.000000e+00> : vector<1xf32>
    %72 = vector.multi_reduction <add>, %71, %cst_19 [1, 2] : vector<1x2x128xf32> to vector<1xf32>
    %73 = vector.shape_cast %72 : vector<1xf32> to vector<1x1x1xf32>
    %74 = vector.extract %73[0, 0, 0] : f32 from vector<1x1x1xf32>
    %c0_20 = arith.constant 0 : index
    %c4 = arith.constant 4 : index
    %c0_21 = arith.constant 0 : index
    %75 = vector.load %arg5[%c0_20, %c4, %c0_21] : memref<2x5x128xf32, #tpu.memory_space<vmem>>, vector<2x1x128xf32>
    %76 = vector.shape_cast %75 : vector<2x1x128xf32> to vector<2x128xf32>
    %c0_22 = arith.constant 0 : index
    %c4_23 = arith.constant 4 : index
    %c0_24 = arith.constant 0 : index
    %77 = vector.load %arg4[%c0_22, %c4_23, %c0_24] : memref<2x5x128xf32, #tpu.memory_space<vmem>>, vector<2x1x128xf32>
    %78 = vector.shape_cast %77 : vector<2x1x128xf32> to vector<2x128xf32>
    %79 = arith.subf %76, %78 : vector<2x128xf32>
    %80 = math.cos %79 : vector<2x128xf32>
    %cst_25 = arith.constant 1.000000e+00 : f32
    %81 = vector.broadcast %cst_25 : f32 to vector<2x128xf32>
    %82 = arith.subf %81, %80 : vector<2x128xf32>
    %83 = vector.shape_cast %82 : vector<2x128xf32> to vector<1x2x128xf32>
    %cst_26 = arith.constant dense<0.000000e+00> : vector<1xf32>
    %84 = vector.multi_reduction <add>, %83, %cst_26 [1, 2] : vector<1x2x128xf32> to vector<1xf32>
    %85 = vector.shape_cast %84 : vector<1xf32> to vector<1x1x1xf32>
    %86 = vector.extract %85[0, 0, 0] : f32 from vector<1x1x1xf32>
    %87 = tpu.iota {dimensions = array<i32: 2>} : vector<1x8x128xi32>
    %c0_i32 = arith.constant 0 : i32
    %88 = vector.broadcast %c0_i32 : i32 to vector<1x8x128xi32>
    %89 = arith.cmpi eq, %87, %88 : vector<1x8x128xi32>
    %cst_27 = arith.constant 0.000000e+00 : f32
    %90 = vector.broadcast %15 : f32 to vector<1x8x128xf32>
    %91 = vector.broadcast %cst_27 : f32 to vector<1x8x128xf32>
    %92 = arith.select %89, %90, %91 : vector<1x8x128xi1>, vector<1x8x128xf32>
    %c1_i32 = arith.constant 1 : i32
    %93 = vector.broadcast %c1_i32 : i32 to vector<1x8x128xi32>
    %94 = arith.cmpi eq, %87, %93 : vector<1x8x128xi32>
    %cst_28 = arith.constant 0.000000e+00 : f32
    %95 = vector.broadcast %21 : f32 to vector<1x8x128xf32>
    %96 = vector.broadcast %cst_28 : f32 to vector<1x8x128xf32>
    %97 = arith.select %94, %95, %96 : vector<1x8x128xi1>, vector<1x8x128xf32>
    %98 = arith.addf %92, %97 : vector<1x8x128xf32>
    %c2_i32 = arith.constant 2 : i32
    %99 = vector.broadcast %c2_i32 : i32 to vector<1x8x128xi32>
    %100 = arith.cmpi eq, %87, %99 : vector<1x8x128xi32>
    %cst_29 = arith.constant 0.000000e+00 : f32
    %101 = vector.broadcast %27 : f32 to vector<1x8x128xf32>
    %102 = vector.broadcast %cst_29 : f32 to vector<1x8x128xf32>
    %103 = arith.select %100, %101, %102 : vector<1x8x128xi1>, vector<1x8x128xf32>
    %104 = arith.addf %98, %103 : vector<1x8x128xf32>
    %c3_i32 = arith.constant 3 : i32
    %105 = vector.broadcast %c3_i32 : i32 to vector<1x8x128xi32>
    %106 = arith.cmpi eq, %87, %105 : vector<1x8x128xi32>
    %cst_30 = arith.constant 0.000000e+00 : f32
    %107 = vector.broadcast %74 : f32 to vector<1x8x128xf32>
    %108 = vector.broadcast %cst_30 : f32 to vector<1x8x128xf32>
    %109 = arith.select %106, %107, %108 : vector<1x8x128xi1>, vector<1x8x128xf32>
    %110 = arith.addf %104, %109 : vector<1x8x128xf32>
    %c4_i32 = arith.constant 4 : i32
    %111 = vector.broadcast %c4_i32 : i32 to vector<1x8x128xi32>
    %112 = arith.cmpi eq, %87, %111 : vector<1x8x128xi32>
    %cst_31 = arith.constant 0.000000e+00 : f32
    %113 = vector.broadcast %86 : f32 to vector<1x8x128xf32>
    %114 = vector.broadcast %cst_31 : f32 to vector<1x8x128xf32>
    %115 = arith.select %112, %113, %114 : vector<1x8x128xi1>, vector<1x8x128xf32>
    %116 = arith.addf %110, %115 : vector<1x8x128xf32>
    %c0_32 = arith.constant 0 : index
    %c0_33 = arith.constant 0 : index
    %c0_34 = arith.constant 0 : index
    %117 = vector.load %arg6[%c0_32, %c0_33, %c0_34] : memref<1x8x128xf32, #tpu.memory_space<vmem>>, vector<1x8x128xf32>
    tpu.vector_store %arg6[%c0_32, %c0_33, %c0_34], %116 {strides = array<i32>} : memref<1x8x128xf32, #tpu.memory_space<vmem>>, vector<1x8x128xf32>,
    return
  }
  func.func @transform_0(%arg0: i32) -> (i32, i32) {
    %c0_i32 = arith.constant 0 : i32
    %c0_i32_0 = arith.constant 0 : i32
    return %c0_i32, %arg0 : i32, i32
  }
  func.func @transform_1(%arg0: i32) -> (i32, i32) {
    %c0_i32 = arith.constant 0 : i32
    %c0_i32_0 = arith.constant 0 : i32
    return %c0_i32, %arg0 : i32, i32
  }
  func.func @transform_2(%arg0: i32) -> (i32, i32) {
    %c0_i32 = arith.constant 0 : i32
    %c0_i32_0 = arith.constant 0 : i32
    return %c0_i32, %arg0 : i32, i32
  }
  func.func @transform_3(%arg0: i32) -> (i32, i32, i32) {
    %c0_i32 = arith.constant 0 : i32
    %c0_i32_0 = arith.constant 0 : i32
    %c0_i32_1 = arith.constant 0 : i32
    return %c0_i32, %c0_i32_0, %arg0 : i32, i32, i32
  }
  func.func @transform_4(%arg0: i32) -> (i32, i32, i32) {
    %c0_i32 = arith.constant 0 : i32
    %c0_i32_0 = arith.constant 0 : i32
    %c0_i32_1 = arith.constant 0 : i32
    return %c0_i32, %c0_i32_0, %arg0 : i32, i32, i32
  }
  func.func @transform_5(%arg0: i32) -> (i32, i32, i32) {
    %c0_i32 = arith.constant 0 : i32
    %c0_i32_0 = arith.constant 0 : i32
    %c0_i32_1 = arith.constant 0 : i32
    return %arg0, %c0_i32, %c0_i32_0 : i32, i32, i32
  }
}

</mosaic_0001>

<llo_original>
// kernel: tpu_custom_call.1
$region0: #{tpu_custom_call.1}
  #allocation0 [shape = 'u32[]', space=smem, size = 0x4, offset = 0x4, fixed_abs, tag = 'smem constant byte address 0x4 - core index']
  #allocation1 [shape = 'u32[144,128]{1,0:T(1,128)}', space=vmem, size = 0x12000, scoped, tag = 'internal scratch']
  %s0 = inlined_call_operand.vmem [shape: f32[2,256], index: 0, kind: input, shape index: {}]
  %s1 = inlined_call_operand.vmem [shape: f32[2,256], index: 1, kind: input, shape index: {}]
  %s2 = inlined_call_operand.vmem [shape: f32[2,256], index: 2, kind: input, shape index: {}]
  %s3 = inlined_call_operand.vmem [shape: f32[2,5,256], index: 3, kind: input, shape index: {}]
  %s4 = inlined_call_operand.vmem [shape: f32[2,5,256], index: 4, kind: input, shape index: {}]
  %s5 = inlined_call_operand.hbm [shape: f32[2,8,128], index: 5, kind: output, shape index: {}]
  %s6 = sld [smem:[#allocation0]]
  $region129: #{tpu_custom_call.1} parent=0
    _
  %s8 = ssub.s32 1, %s6
  %s9 = scalar_select 0, %s8, %s6
  $region1: #{tpu_custom_call.1} parent=0
    #allocation2 [shape = 'u8[16384]{0}', space=vmem, size = 0x4000, scoped, tag = 'input window, operand 3']
    #allocation3 [shape = 'u8[16384]{0}', space=vmem, size = 0x4000, scoped, tag = 'input window, operand 4']
    #allocation4 [shape = 'u8[8192]{0}', space=vmem, size = 0x2000, scoped, tag = 'output window, operand 0']
    #allocation5 [shape = 's32[2]{0}', space=sflag, size = 0x8, scoped, tag = 'scoped memory for tpu_custom_call.1']
    %10 = vsyncpa [#allocation5], 0
    %s11 = scalar_lea.sflag [#allocation5], 1
    %12 = vsyncpa %s11, 0
    loop: start=0, step=1, limit=4
    $region2: #{tpu_custom_call.1} parent=1 // loop_pre_header
      _
    $region3: #{tpu_custom_call.1} parent=1 // loop_header
      %s14 = sphi 0, %s18
      %p15 = scmp.ge.s32.totalorder %s14, 4
      %s24 = sphi 0, %s26
      %s27 = sphi 0, %s24
      %s28 = sphi 0, %s27
      %s44 = sphi 0, %s28
      %s50 = sphi 0, %s52
      %s53 = sphi 0, %s50
      %s54 = sphi 0, %s53
      %s70 = sphi 0, %s54
      %s76 = sphi 0, %s78
      %s79 = sphi 0, %s76
      %s80 = sphi 0, %s79
      %s96 = sphi 0, %s80
      %s102 = sphi 0, %s104
      %s105 = sphi 0, %s102
      %s106 = sphi 0, %s105
      %s122 = sphi 0, %s106
      %s128 = sphi 0, %s130
      %s131 = sphi 0, %s128
      %s132 = sphi 0, %s131
      %s148 = sphi 0, %s132
      %s154 = sphi 0, %s156
      %s157 = sphi 0, %s154
      %s158 = sphi 0, %s157
      %s174 = sphi 0, %s158
    $region4: #{tpu_custom_call.1} parent=1 // loop_header_branch
      %17 = sbr.rel (%p15) target = $region8
    $region5: #{tpu_custom_call.1} parent=1 // loop_body
      %s19 = ssub.s32 %s14, 1
      %s20 = ssub.s32 %s14, 2
      %s21 = sadd.s32 %s14, 1
      %s22 = ssub.s32 %s14, %s21
      %p23 = scmp.eq.s32.totalorder %s22, 0
      %s25 = sadd.s32 %s24, 1
      %s26 = scalar_select %p23, %s24, %s25
      %p29 = pneg %p23
      %p30 = scmp.eq.s32.totalorder %s14, 1
      %p31 = por %p29, %p30
      %p32 = scmp.ne.s32.totalorder %s24, %s27
      %p33 = scmp.eq.s32.totalorder %s14, 0
      %p34 = por %p32, %p33
      %p35 = scmp.ne.s32.totalorder %s24, %s27
      %p36 = scmp.eq.s32.totalorder %s19, 1
      %p37 = por %p35, %p36
      %p38 = scmp.ne.s32.totalorder %s27, %s28
      %p39 = scmp.eq.s32.totalorder %s19, 0
      %p40 = por %p38, %p39
      %p41 = scmp.ne.s32.totalorder %s27, %s28
      %p42 = scmp.eq.s32.totalorder %s20, 1
      %p43 = por %p41, %p42
      %p45 = scmp.ne.s32.totalorder %s28, %s44
      %p46 = scmp.eq.s32.totalorder %s20, 0
      %p47 = por %p45, %p46
      %s48 = ssub.s32 %s14, %s21
      %p49 = scmp.eq.s32.totalorder %s48, 0
      %s51 = sadd.s32 %s50, 1
      %s52 = scalar_select %p49, %s50, %s51
      %p55 = pneg %p49
      %p56 = scmp.eq.s32.totalorder %s14, 1
      %p57 = por %p55, %p56
      %p58 = scmp.ne.s32.totalorder %s50, %s53
      %p59 = scmp.eq.s32.totalorder %s14, 0
      %p60 = por %p58, %p59
      %p61 = scmp.ne.s32.totalorder %s50, %s53
      %p62 = scmp.eq.s32.totalorder %s19, 1
      %p63 = por %p61, %p62
      %p64 = scmp.ne.s32.totalorder %s53, %s54
      %p65 = scmp.eq.s32.totalorder %s19, 0
      %p66 = por %p64, %p65
      %p67 = scmp.ne.s32.totalorder %s53, %s54
      %p68 = scmp.eq.s32.totalorder %s20, 1
      %p69 = por %p67, %p68
      %p71 = scmp.ne.s32.totalorder %s54, %s70
      %p72 = scmp.eq.s32.totalorder %s20, 0
      %p73 = por %p71, %p72
      %s74 = ssub.s32 %s14, %s21
      %p75 = scmp.eq.s32.totalorder %s74, 0
      %s77 = sadd.s32 %s76, 1
      %s78 = scalar_select %p75, %s76, %s77
      %p81 = pneg %p75
      %p82 = scmp.eq.s32.totalorder %s14, 1
      %p83 = por %p81, %p82
      %p84 = scmp.ne.s32.totalorder %s76, %s79
      %p85 = scmp.eq.s32.totalorder %s14, 0
      %p86 = por %p84, %p85
      %p87 = scmp.ne.s32.totalorder %s76, %s79
      %p88 = scmp.eq.s32.totalorder %s19, 1
      %p89 = por %p87, %p88
      %p90 = scmp.ne.s32.totalorder %s79, %s80
      %p91 = scmp.eq.s32.totalorder %s19, 0
      %p92 = por %p90, %p91
      %p93 = scmp.ne.s32.totalorder %s79, %s80
      %p94 = scmp.eq.s32.totalorder %s20, 1
      %p95 = por %p93, %p94
      %p97 = scmp.ne.s32.totalorder %s80, %s96
      %p98 = scmp.eq.s32.totalorder %s20, 0
      %p99 = por %p97, %p98
      %s100 = ssub.s32 %s14, %s21
      %p101 = scmp.eq.s32.totalorder %s100, 0
      %s103 = sadd.s32 %s102, 1
      %s104 = scalar_select %p101, %s102, %s103
      %p107 = pneg %p101
      %p108 = scmp.eq.s32.totalorder %s14, 1
      %p109 = por %p107, %p108
      %p110 = scmp.ne.s32.totalorder %s102, %s105
      %p111 = scmp.eq.s32.totalorder %s14, 0
      %p112 = por %p110, %p111
      %p113 = scmp.ne.s32.totalorder %s102, %s105
      %p114 = scmp.eq.s32.totalorder %s19, 1
      %p115 = por %p113, %p114
      %p116 = scmp.ne.s32.totalorder %s105, %s106
      %p117 = scmp.eq.s32.totalorder %s19, 0
      %p118 = por %p116, %p117
      %p119 = scmp.ne.s32.totalorder %s105, %s106
      %p120 = scmp.eq.s32.totalorder %s20, 1
      %p121 = por %p119, %p120
      %p123 = scmp.ne.s32.totalorder %s106, %s122
      %p124 = scmp.eq.s32.totalorder %s20, 0
      %p125 = por %p123, %p124
      %s126 = ssub.s32 %s14, %s21
      %p127 = scmp.eq.s32.totalorder %s126, 0
      %s129 = sadd.s32 %s128, 1
      %s130 = scalar_select %p127, %s128, %s129
      %p133 = pneg %p127
      %p134 = scmp.eq.s32.totalorder %s14, 1
      %p135 = por %p133, %p134
      %p136 = scmp.ne.s32.totalorder %s128, %s131
      %p137 = scmp.eq.s32.totalorder %s14, 0
      %p138 = por %p136, %p137
      %p139 = scmp.ne.s32.totalorder %s128, %s131
      %p140 = scmp.eq.s32.totalorder %s19, 1
      %p141 = por %p139, %p140
      %p142 = scmp.ne.s32.totalorder %s131, %s132
      %p143 = scmp.eq.s32.totalorder %s19, 0
      %p144 = por %p142, %p143
      %p145 = scmp.ne.s32.totalorder %s131, %s132
      %p146 = scmp.eq.s32.totalorder %s20, 1
      %p147 = por %p145, %p146
      %p149 = scmp.ne.s32.totalorder %s132, %s148
      %p150 = scmp.eq.s32.totalorder %s20, 0
      %p151 = por %p149, %p150
      %s152 = ssub.s32 %s14, %s21
      %p153 = scmp.eq.s32.totalorder %s152, 0
      %s155 = sadd.s32 %s154, 1
      %s156 = scalar_select %p153, %s154, %s155
      %p159 = pneg %p153
      %p160 = scmp.eq.s32.totalorder %s14, 1
      %p161 = por %p159, %p160
      %p162 = scmp.ne.s32.totalorder %s154, %s157
      %p163 = scmp.eq.s32.totalorder %s14, 0
      %p164 = por %p162, %p163
      %p165 = scmp.ne.s32.totalorder %s154, %s157
      %p166 = scmp.eq.s32.totalorder %s19, 1
      %p167 = por %p165, %p166
      %p168 = scmp.ne.s32.totalorder %s157, %s158
      %p169 = scmp.eq.s32.totalorder %s19, 0
      %p170 = por %p168, %p169
      %p171 = scmp.ne.s32.totalorder %s157, %s158
      %p172 = scmp.eq.s32.totalorder %s20, 1
      %p173 = por %p171, %p172
      %p175 = scmp.ne.s32.totalorder %s158, %s174
      %p176 = scmp.eq.s32.totalorder %s20, 0
      %p177 = por %p175, %p176
      %p178 = scmp.le.s32.totalorder 1, %s14
      %p179 = scmp.lt.s32.totalorder %s14, 3
      %p180 = pnand %p178, %p179
      %p181 = pneg %p180
      // Predicated region
      $region9: #{tpu_custom_call.1} parent=5 // pred_check
        _
      $region10: #{tpu_custom_call.1} parent=5 // pred_check_branch
        %183 = sbr.rel (%p180) target = $region12
      $region11: #{tpu_custom_call.1} parent=5 // pred_region
        %s184 = ssub.s32 %s14, 1
      $region12: #{tpu_custom_call.1} parent=5 // pred_fallthru
        _
      %p185 = scmp.lt.s32.totalorder %s14, 2
      // Predicated region
      $region13: #{tpu_custom_call.1} parent=5 // pred_check
        %p186 = pneg %p185
      $region14: #{tpu_custom_call.1} parent=5 // pred_check_branch
        %188 = sbr.rel (%p186) target = $region16
      $region15: #{tpu_custom_call.1} parent=5 // pred_region
        // Predicated region
        $region17: #{tpu_custom_call.1} parent=15 // pred_check
          %p189 = pneg %p34
        $region18: #{tpu_custom_call.1} parent=15 // pred_check_branch
          %191 = sbr.rel (%p189) target = $region20
        $region19: #{tpu_custom_call.1} parent=15 // pred_region
          %p192 = scmp.lt.s32.totalorder %s14, 1
          %s193 = scalar_select %p192, %s14, 1
          %s194 = smul.addr %s193, 2
          %s195 = scalar_lea.vmem %s0, %s194
        $region20: #{tpu_custom_call.1} parent=15 // pred_fallthru
          _
        // Predicated region
        $region21: #{tpu_custom_call.1} parent=15 // pred_check
          %p196 = pneg %p60
        $region22: #{tpu_custom_call.1} parent=15 // pred_check_branch
          %198 = sbr.rel (%p196) target = $region24
        $region23: #{tpu_custom_call.1} parent=15 // pred_region
          %p199 = scmp.lt.s32.totalorder %s14, 1
          %s200 = scalar_select %p199, %s14, 1
          %s201 = smul.addr %s200, 2
          %s202 = scalar_lea.vmem %s1, %s201
        $region24: #{tpu_custom_call.1} parent=15 // pred_fallthru
          _
        // Predicated region
        $region25: #{tpu_custom_call.1} parent=15 // pred_check
          %p203 = pneg %p86
        $region26: #{tpu_custom_call.1} parent=15 // pred_check_branch
          %205 = sbr.rel (%p203) target = $region28
        $region27: #{tpu_custom_call.1} parent=15 // pred_region
          %p206 = scmp.lt.s32.totalorder %s14, 1
          %s207 = scalar_select %p206, %s14, 1
          %s208 = smul.addr %s207, 2
          %s209 = scalar_lea.vmem %s2, %s208
        $region28: #{tpu_custom_call.1} parent=15 // pred_fallthru
          _
        // Predicated region
        $region29: #{tpu_custom_call.1} parent=15 // pred_check
          %p210 = pneg %p112
        $region30: #{tpu_custom_call.1} parent=15 // pred_check_branch
          %212 = sbr.rel (%p210) target = $region32
        $region31: #{tpu_custom_call.1} parent=15 // pred_region
          %s213 = sand.u32 %s102, 1
          %s214 = sand.u32 %s102, 1
          %s215 = smul.addr %s214, 16
          %s216 = scalar_lea.vmem [#allocation2], %s215
          %s217 = smul.addr %s14, 8
          %s218 = scalar_lea.vmem %s3, %s217
          // Predicated region
          $region33: #{tpu_custom_call.1} parent=31 // pred_check
            _
          $region34: #{tpu_custom_call.1} parent=31 // pred_check_branch
            %220 = sbr.rel (0) target = $region36
          $region35: #{tpu_custom_call.1} parent=31 // pred_region
            // Predicated region
            $region37: #{tpu_custom_call.1} parent=35 // pred_check
              _
            $region38: #{tpu_custom_call.1} parent=35 // pred_check_branch
              %222 = sbr.rel (0) target = $region40
            $region39: #{tpu_custom_call.1} parent=35 // pred_region
              // Predicated region
              $region52: #{tpu_custom_call.1} parent=39 // pred_check
                _
              $region53: #{tpu_custom_call.1} parent=39 // pred_check_branch
                %239 = sbr.rel (0) target = $region55
              $region54: #{tpu_custom_call.1} parent=39 // pred_region
                loop: start=0, step=1, limit=1
                $region56: #{tpu_custom_call.1} parent=54 // loop_pre_header
                  _
                $region57: #{tpu_custom_call.1} parent=54 // loop_header
                  %s241 = sphi 0, %s245
                  %p242 = scmp.ge.s32.totalorder %s241, 1
                  %s246 = sphi %s218, %s218
                  %s247 = sphi %s216, %s216
                $region58: #{tpu_custom_call.1} parent=54 // loop_header_branch
                  %244 = sbr.rel (%p242) target = $region62
                $region59: #{tpu_custom_call.1} parent=54 // loop_body
                  %v248 = vld [vmem:[%s246] sm:$0xff]
                  %249 = vst [vmem:[%s247] sm:$0xff] %v248
                  %v250 = vld [vmem:[%s246 + $0x10] sm:$0xff]
                  %251 = vst [vmem:[%s247 + $0x8] sm:$0xff] %v250
                $region60: #{tpu_custom_call.1} parent=54 // loop_footer
                  %s245 = sadd.s32 1, %s241
                $region61: #{tpu_custom_call.1} parent=54 // loop_footer_branch
                  %240 = sbr.rel target = $region57
                $region62: #{tpu_custom_call.1} parent=54 // loop_exit
                  _
              $region55: #{tpu_custom_call.1} parent=39 // pred_fallthru
                _
              // Predicated region
              $region63: #{tpu_custom_call.1} parent=39 // pred_check
                _
              $region64: #{tpu_custom_call.1} parent=39 // pred_check_branch
                %253 = sbr.rel target = $region66
              $region65: #{tpu_custom_call.1} parent=39 // pred_region
                _
              $region66: #{tpu_custom_call.1} parent=39 // pred_fallthru
                _
            $region40: #{tpu_custom_call.1} parent=35 // pred_fallthru
              _
            // Predicated region
            $region41: #{tpu_custom_call.1} parent=35 // pred_check
              _
            $region42: #{tpu_custom_call.1} parent=35 // pred_check_branch
              %224 = sbr.rel target = $region44
            $region43: #{tpu_custom_call.1} parent=35 // pred_region
              loop: start=0, step=1, limit=1
              $region45: #{tpu_custom_call.1} parent=43 // loop_pre_header
                _
              $region46: #{tpu_custom_call.1} parent=43 // loop_header
                %s227 = sphi 0, %s231
                %p228 = scmp.ge.s32.totalorder %s227, 1
                %s232 = sphi %s218, %s218
                %s233 = sphi %s216, %s216
              $region47: #{tpu_custom_call.1} parent=43 // loop_header_branch
                %230 = sbr.rel (%p228) target = $region51
              $region48: #{tpu_custom_call.1} parent=43 // loop_body
                %v234 = vld [vmem:[%s232] sm:$0xff]
                %235 = vst [vmem:[%s233] sm:$0xff] %v234
                %v236 = vld [vmem:[%s232 + $0x10] sm:$0xff]
                %237 = vst [vmem:[%s233 + $0x8] sm:$0xff] %v236
              $region49: #{tpu_custom_call.1} parent=43 // loop_footer
                %s231 = sadd.s32 1, %s227
              $region50: #{tpu_custom_call.1} parent=43 // loop_footer_branch
                %226 = sbr.rel target = $region46
              $region51: #{tpu_custom_call.1} parent=43 // loop_exit
                _
            $region44: #{tpu_custom_call.1} parent=35 // pred_fallthru
              _
          $region36: #{tpu_custom_call.1} parent=31 // pred_fallthru
            _
          %254 = vnop
        $region32: #{tpu_custom_call.1} parent=15 // pred_fallthru
          _
        // Predicated region
        $region67: #{tpu_custom_call.1} parent=15 // pred_check
          %p255 = pneg %p138
        $region68: #{tpu_custom_call.1} parent=15 // pred_check_branch
          %257 = sbr.rel (%p255) target = $region70
        $region69: #{tpu_custom_call.1} parent=15 // pred_region
          %s258 = sand.u32 %s128, 1
          %s259 = sand.u32 %s128, 1
          %s260 = smul.addr %s259, 16
          %s261 = scalar_lea.vmem [#allocation3], %s260
          %s262 = smul.addr %s14, 8
          %s263 = scalar_lea.vmem %s4, %s262
          // Predicated region
          $region71: #{tpu_custom_call.1} parent=69 // pred_check
            _
          $region72: #{tpu_custom_call.1} parent=69 // pred_check_branch
            %265 = sbr.rel (0) target = $region74
          $region73: #{tpu_custom_call.1} parent=69 // pred_region
            // Predicated region
            $region75: #{tpu_custom_call.1} parent=73 // pred_check
              _
            $region76: #{tpu_custom_call.1} parent=73 // pred_check_branch
              %267 = sbr.rel (0) target = $region78
            $region77: #{tpu_custom_call.1} parent=73 // pred_region
              // Predicated region
              $region90: #{tpu_custom_call.1} parent=77 // pred_check
                _
              $region91: #{tpu_custom_call.1} parent=77 // pred_check_branch
                %284 = sbr.rel (0) target = $region93
              $region92: #{tpu_custom_call.1} parent=77 // pred_region
                loop: start=0, step=1, limit=1
                $region94: #{tpu_custom_call.1} parent=92 // loop_pre_header
                  _
                $region95: #{tpu_custom_call.1} parent=92 // loop_header
                  %s286 = sphi 0, %s290
                  %p287 = scmp.ge.s32.totalorder %s286, 1
                  %s291 = sphi %s263, %s263
                  %s292 = sphi %s261, %s261
                $region96: #{tpu_custom_call.1} parent=92 // loop_header_branch
                  %289 = sbr.rel (%p287) target = $region100
                $region97: #{tpu_custom_call.1} parent=92 // loop_body
                  %v293 = vld [vmem:[%s291] sm:$0xff]
                  %294 = vst [vmem:[%s292] sm:$0xff] %v293
                  %v295 = vld [vmem:[%s291 + $0x10] sm:$0xff]
                  %296 = vst [vmem:[%s292 + $0x8] sm:$0xff] %v295
                $region98: #{tpu_custom_call.1} parent=92 // loop_footer
                  %s290 = sadd.s32 1, %s286
                $region99: #{tpu_custom_call.1} parent=92 // loop_footer_branch
                  %285 = sbr.rel target = $region95
                $region100: #{tpu_custom_call.1} parent=92 // loop_exit
                  _
              $region93: #{tpu_custom_call.1} parent=77 // pred_fallthru
                _
              // Predicated region
              $region101: #{tpu_custom_call.1} parent=77 // pred_check
                _
              $region102: #{tpu_custom_call.1} parent=77 // pred_check_branch
                %298 = sbr.rel target = $region104
              $region103: #{tpu_custom_call.1} parent=77 // pred_region
                _
              $region104: #{tpu_custom_call.1} parent=77 // pred_fallthru
                _
            $region78: #{tpu_custom_call.1} parent=73 // pred_fallthru
              _
            // Predicated region
            $region79: #{tpu_custom_call.1} parent=73 // pred_check
              _
            $region80: #{tpu_custom_call.1} parent=73 // pred_check_branch
              %269 = sbr.rel target = $region82
            $region81: #{tpu_custom_call.1} parent=73 // pred_region
              loop: start=0, step=1, limit=1
              $region83: #{tpu_custom_call.1} parent=81 // loop_pre_header
                _
              $region84: #{tpu_custom_call.1} parent=81 // loop_header
                %s272 = sphi 0, %s276
                %p273 = scmp.ge.s32.totalorder %s272, 1
                %s277 = sphi %s263, %s263
                %s278 = sphi %s261, %s261
              $region85: #{tpu_custom_call.1} parent=81 // loop_header_branch
                %275 = sbr.rel (%p273) target = $region89
              $region86: #{tpu_custom_call.1} parent=81 // loop_body
                %v279 = vld [vmem:[%s277] sm:$0xff]
                %280 = vst [vmem:[%s278] sm:$0xff] %v279
                %v281 = vld [vmem:[%s277 + $0x10] sm:$0xff]
                %282 = vst [vmem:[%s278 + $0x8] sm:$0xff] %v281
              $region87: #{tpu_custom_call.1} parent=81 // loop_footer
                %s276 = sadd.s32 1, %s272
              $region88: #{tpu_custom_call.1} parent=81 // loop_footer_branch
                %271 = sbr.rel target = $region84
              $region89: #{tpu_custom_call.1} parent=81 // loop_exit
                _
            $region82: #{tpu_custom_call.1} parent=73 // pred_fallthru
              _
          $region74: #{tpu_custom_call.1} parent=69 // pred_fallthru
            _
          %299 = vnop
        $region70: #{tpu_custom_call.1} parent=15 // pred_fallthru
          _
      $region16: #{tpu_custom_call.1} parent=5 // pred_fallthru
        _
      %p300 = scmp.le.s32.totalorder 1, %s14
      %p301 = scmp.lt.s32.totalorder %s14, 3
      %p302 = pnand %p300, %p301
      %p303 = pneg %p302
      // Predicated region
      $region105: #{tpu_custom_call.1} parent=5 // pred_check
        _
      $region106: #{tpu_custom_call.1} parent=5 // pred_check_branch
        %305 = sbr.rel (%p302) target = $region108
      $region107: #{tpu_custom_call.1} parent=5 // pred_region
        %s306 = ssub.s32 %s14, 1
        %s307 = sand.u32 %s105, 1
        %s308 = sand.u32 %s105, 1
        %s309 = smul.addr %s308, 16
        %s310 = scalar_lea.vmem [#allocation2], %s309
        // Predicated region
        $region109: #{tpu_custom_call.1} parent=107 // pred_check
          %p311 = pneg %p118
        $region110: #{tpu_custom_call.1} parent=107 // pred_check_branch
          %313 = sbr.rel (%p311) target = $region112
        $region111: #{tpu_custom_call.1} parent=107 // pred_region
          _
        $region112: #{tpu_custom_call.1} parent=107 // pred_fallthru
          _
        %s314 = sand.u32 %s131, 1
        %s315 = sand.u32 %s131, 1
        %s316 = smul.addr %s315, 16
        %s317 = scalar_lea.vmem [#allocation3], %s316
        // Predicated region
        $region113: #{tpu_custom_call.1} parent=107 // pred_check
          %p318 = pneg %p144
        $region114: #{tpu_custom_call.1} parent=107 // pred_check_branch
          %320 = sbr.rel (%p318) target = $region116
        $region115: #{tpu_custom_call.1} parent=107 // pred_region
          _
        $region116: #{tpu_custom_call.1} parent=107 // pred_fallthru
          _
        %p321 = scmp.lt.s32.totalorder %s19, 1
        %s322 = scalar_select %p321, %s19, 1
        %s323 = smul.addr %s322, 2
        %s324 = scalar_lea.vmem %s0, %s323
        %p325 = pneg %p40
        %p326 = pneg %p37
        %p327 = scmp.lt.s32.totalorder %s19, 1
        %s328 = scalar_select %p327, %s19, 1
        %s329 = smul.addr %s328, 2
        %s330 = scalar_lea.vmem %s1, %s329
        %p331 = pneg %p66
        %p332 = pneg %p63
        %p333 = scmp.lt.s32.totalorder %s19, 1
        %s334 = scalar_select %p333, %s19, 1
        %s335 = smul.addr %s334, 2
        %s336 = scalar_lea.vmem %s2, %s335
        %p337 = pneg %p92
        %p338 = pneg %p89
        %s339 = sand.u32 %s105, 1
        %s340 = sand.u32 %s105, 1
        %s341 = smul.addr %s340, 16
        %s342 = scalar_lea.vmem [#allocation2], %s341
        %p343 = pneg %p118
        %p344 = pneg %p115
        %s345 = sand.u32 %s131, 1
        %s346 = sand.u32 %s131, 1
        %s347 = smul.addr %s346, 16
        %s348 = scalar_lea.vmem [#allocation3], %s347
        %p349 = pneg %p144
        %p350 = pneg %p141
        %p351 = pneg %p170
        %p352 = pneg %p167
        %s353 = sand.u32 %s157, 1
        %s354 = scalar_lea.sflag [#allocation5], %s353
        %s355 = sand.u32 %s157, 1
        %s356 = smul.addr %s355, 8
        %s357 = scalar_lea.vmem [#allocation4], %s356
        %p358 = scmp.lt.s32.totalorder %s19, 1
        %s359 = scalar_select %p358, %s19, 1
        %s360 = smul.addr %s359, 2
        %s361 = scalar_lea.vmem %s0, %s360
        %p362 = scmp.lt.s32.totalorder %s19, 1
        %s363 = scalar_select %p362, %s19, 1
        %s364 = smul.addr %s363, 2
        %s365 = scalar_lea.vmem %s1, %s364
        %p366 = scmp.lt.s32.totalorder %s19, 1
        %s367 = scalar_select %p366, %s19, 1
        %s368 = smul.addr %s367, 2
        %s369 = scalar_lea.vmem %s2, %s368
        %v370 = vld [vmem:[%s361] sm:$0x3]
        %v371 = vld [vmem:[%s365] sm:$0x3]
        %v372 = vld [vmem:[%s369] sm:$0x3]
        %v373 = vsub.f32 1.0, %v372
        %v374 = vmul.f32 %v371, %v373
        %vm375 = vcmp.gt.f32.partialorder %v370, 0.5
        %v376 = vsub.f32 1.0, %v374
        %v377 = vsel %vm375, %v374, %v376
        %v378 = vlog2.pop %v377
        %v379 = vmul.f32 %v378, 0.6931472
        %vm380 = vcmask 1041408
        %v381 = vsel %vm380, %v370, 0.0
        %382 = vadd.xlane.f32.xlu0 %v381
        %v383 = vpop.xlane.xlu0 %382
        %v384 = vrot.slane %v383, 4
        %v385 = vadd.f32 %v383, %v384
        %v386 = vrot.slane %v385, 2
        %v387 = vadd.f32 %v385, %v386
        %v388 = vrot.slane %v387, 1
        %v389 = vadd.f32 %v387, %v388
        %s390 = vtos %v389
        %v391 = vsel %vm375, %v379, 0.0
        %v392 = vsel %vm380, %v391, 0.0
        %393 = vadd.xlane.f32.xlu0 %v392
        %v394 = vpop.xlane.xlu0 %393
        %v395 = vrot.slane %v394, 4
        %v396 = vadd.f32 %v394, %v395
        %v397 = vrot.slane %v396, 2
        %v398 = vadd.f32 %v396, %v397
        %v399 = vrot.slane %v398, 1
        %v400 = vadd.f32 %v398, %v399
        %s401 = vtos %v400
        %v402 = vsel %vm375, 0.0, %v379
        %v403 = vsel %vm380, %v402, 0.0
        %404 = vadd.xlane.f32.xlu0 %v403
        %v405 = vpop.xlane.xlu0 %404
        %v406 = vrot.slane %v405, 4
        %v407 = vadd.f32 %v405, %v406
        %v408 = vrot.slane %v407, 2
        %v409 = vadd.f32 %v407, %v408
        %v410 = vrot.slane %v409, 1
        %v411 = vadd.f32 %v409, %v410
        %s412 = vtos %v411
        %v413 = vld [vmem:[%s310] sm:$0xf]
        %v414 = vld [vmem:[%s310 + $0x8] sm:$0xf]
        %v415 = vld [vmem:[%s317] sm:$0xf]
        %v416 = vld [vmem:[%s317 + $0x8] sm:$0xf]
        %v417 = vmin.f32 %v413, %v415
        %v418 = vmin.f32 %v414, %v416
        %v421 = vrot.slane %v417, 1
        %v422 = vrot.slane %v418, 1
        %v425 = vadd.f32 %v417, %v421
        %v426 = vadd.f32 %v418, %v422
        %v429 = vrot.slane %v425, 2
        %v430 = vrot.slane %v426, 2
        %v433 = vmul.f32 %v425, %v429
        %v434 = vmul.f32 %v426, %v430
        %v437 = vrot.slane %v415, 1
        %v438 = vrot.slane %v416, 1
        %v441 = vadd.f32 %v415, %v437
        %v442 = vadd.f32 %v416, %v438
        %v445 = vrot.slane %v441, 2
        %v446 = vrot.slane %v442, 2
        %v449 = vmul.f32 %v441, %v445
        %v450 = vmul.f32 %v442, %v446
        %v453 = vrot.slane %v413, 1
        %v454 = vrot.slane %v414, 1
        %v457 = vadd.f32 %v413, %v453
        %v458 = vadd.f32 %v414, %v454
        %v461 = vrot.slane %v457, 2
        %v462 = vrot.slane %v458, 2
        %v465 = vmul.f32 %v457, %v461
        %v466 = vmul.f32 %v458, %v462
        %v467 = vadd.f32 %v449, %v465
        %v468 = vadd.f32 %v450, %v466
        %v469 = vsub.f32 %v467, %v433
        %v470 = vsub.f32 %v468, %v434
        %v471 = vrcp.pop %v469
        %v472 = vrcp.pop %v470
        %v473 = vmul.f32 %v433, %v471
        %v474 = vmul.f32 %v434, %v472
        %v475 = vlog2.pop %v473
        %v476 = vmul.f32 %v475, 0.6931472
        %v477 = vlog2.pop %v474
        %v478 = vmul.f32 %v477, 0.6931472
        %v479 = vsub.f32 0.0, %v476
        %v480 = vsub.f32 0.0, %v478
        %v483 = vrot.slane %v480, 7
        %vm484 = vcmask 1041409
        %v485 = vsel %vm484, %v483, %v479
        %v487 = vsel %vm380, %v485, 0.0
        %488 = vadd.xlane.f32.xlu0 %v487
        %v489 = vpop.xlane.xlu0 %488
        %v490 = vrot.slane %v489, 4
        %v491 = vadd.f32 %v489, %v490
        %v492 = vrot.slane %v491, 2
        %v493 = vadd.f32 %v491, %v492
        %v494 = vrot.slane %v493, 1
        %v495 = vadd.f32 %v493, %v494
        %s496 = vtos %v495
        %v497 = vld [vmem:[%s317 + $0x4] sm:$0x1]
        %v498 = vld [vmem:[%s317 + $0xc] sm:$0x1]
        %v499 = vld [vmem:[%s310 + $0x4] sm:$0x1]
        %v500 = vld [vmem:[%s310 + $0xc] sm:$0x1]
        %v501 = vsub.f32 %v497, %v499
        %v502 = vsub.f32 %v498, %v500
        %v503 = vand.u32 2147483647, %v501
        %vm504 = vcmp.le.f32.partialorder %v503, 0.7853982
        %vm505 = vcmp.lt.s32.totalorder %v501, 0
        %v506 = vand.u32 %v501, 2139095040
        %v507 = vshrl.u32 %v506, 23
        %v508 = vsub.s32 %v507, 127
        %v509 = vand.u32 2147483647, %v501
        %v510 = vand.u32 %v509, 8388607
        %v511 = vor.u32 %v510, 8388608
        %v512 = vsub.s32 0, %v511
        %v513 = vadd.s32 %v508, 1
        %vm514 = vcmp.gt.s32.totalorder %v513, 0
        %v515 = vsel %vm514, %v513, 0
        %v516 = vshrl.u32 %v515, 5
        %v517 = vand.u32 %v515, 31
        %v518 = vsub.s32 32, %v517
        %v519 = vshrl.u32 683565275, %v518
        %v520 = vshll.u32 683565275, %v517
        %v521 = vshrl.u32 2475754826, %v518
        %v522 = vor.u32 %v520, %v521
        %v523 = vshll.u32 2475754826, %v517
        %v524 = vshrl.u32 2131351028, %v518
        %v525 = vor.u32 %v523, %v524
        %v526 = vshll.u32 2131351028, %v517
        %v527 = vshrl.u32 2102212464, %v518
        %v528 = vor.u32 %v526, %v527
        %v529 = vshll.u32 2102212464, %v517
        %v530 = vshrl.u32 920167782, %v518
        %v531 = vor.u32 %v529, %v530
        %v532 = vshll.u32 920167782, %v517
        %v533 = vshrl.u32 1326507024, %v518
        %v534 = vor.u32 %v532, %v533
        %vm535 = vcmp.lt.s32.totalorder %v516, 1
        %vm536 = vcmp.lt.s32.totalorder %v516, 2
        %vm537 = vcmp.lt.s32.totalorder %v516, 3
        %vm538 = vcmp.lt.s32.totalorder %v516, 4
        %v539 = vsel %vm535, %v519, %v522
        %v540 = vsel %vm538, %v528, 2102212464
        %v541 = vsel %vm537, %v525, %v540
        %v542 = vsel %vm536, %v539, %v541
        %v543 = vsel %vm535, %v522, %v525
        %v544 = vsel %vm538, %v531, 920167782
        %v545 = vsel %vm537, %v528, %v544
        %v546 = vsel %vm536, %v543, %v545
        %v547 = vsel %vm535, %v525, %v528
        %v548 = vsel %vm538, %v534, 1326507024
        %v549 = vsel %vm537, %v531, %v548
        %v550 = vsel %vm536, %v547, %v549
        %v551 = vshll.u32 %v511, 8
        %v552 = vmul.u32.u64.compose %v551, %v550
        %v553 = vextract.low.u32 %v552
        %v554 = vextract.high.u32 %v552
        %v555 = vmul.u32.u64.compose %v551, %v546
        %v556 = vextract.low.u32 %v555
        %v557 = vextract.high.u32 %v555
        %v558 = vmul.u32 %v551, %v542
        %v559 = vadd.s32 %v554, %v556
        %vm560 = vc.u32 %v554, %v556
        %v561 = vadd.s32 %v557, 1
        %v562 = vsel %vm560, %v561, %v557
        %v563 = vadd.s32 %v558, %v562
        %v564 = vadd.s32 %v563, 536870912
        %v565 = vshrl.u32 %v564, 30
        %v566 = vshll.u32 %v565, 30
        %v567 = vsub.s32 %v563, %v566
        %vm568 = vcmp.lt.s32.totalorder %v567, 0
        %v569 = vsub.s32 0, %v567
        %v570 = vsel %vm568, %v569, %v567
        %v571 = vclz %v570
        %v572 = vsub.s32 %v571, 2
        %vm573 = vcmp.gt.s32.totalorder 0, %v572
        %v574 = vsel %vm573, 0, %v572
        %v575 = vsub.s32 32, %v574
        %v576 = vshll.u32 %v567, %v574
        %v577 = vshrl.u32 %v559, %v575
        %v578 = vor.u32 %v576, %v577
        %v579 = vsub.s32 4294967266, %v574
        %v580 = vadd.s32 %v579, 127
        %v581 = vshll.u32 %v580, 23
        %v582 = vor.u32 4788187, %v581
        %v583 = vand.u32 2147483647, %v582
        %v585 = vcvt.s32.f32 %v578
        %v586 = vmul.f32 %v585, %v583
        %v587 = vxor.u32 %v586, 2147483648
        %v588 = vsel %vm505, %v587, %v586
        %v589 = vsub.s32 4, %v565
        %v590 = vsel %vm505, %v589, %v565
        %v591 = vsel %vm504, %v501, %v588
        %v592 = vsel %vm504, 0, %v590
        %v593 = vcosq.f32.pop %v591
        %v594 = vsinq.f32.pop %v591
        %vm595 = vweird.f32 %v501
        %v596 = vand.u32 %v592, 3
        %vm597 = vcmp.lt.s32.totalorder %v596, 2
        %vm598 = vcmp.eq.s32.totalorder %v596, 0
        %v599 = vxor.u32 %v594, 2147483648
        %v600 = vsel %vm598, %v593, %v599
        %vm601 = vcmp.eq.s32.totalorder %v596, 2
        %v602 = vxor.u32 %v593, 2147483648
        %v603 = vsel %vm601, %v602, %v594
        %v604 = vsel %vm597, %v600, %v603
        %v605 = vsel %vm595, nan, %v604
        %v606 = vand.u32 2147483647, %v502
        %vm607 = vcmp.le.f32.partialorder %v606, 0.7853982
        %vm608 = vcmp.lt.s32.totalorder %v502, 0
        %v609 = vand.u32 %v502, 2139095040
        %v610 = vshrl.u32 %v609, 23
        %v611 = vsub.s32 %v610, 127
        %v612 = vand.u32 2147483647, %v502
        %v613 = vand.u32 %v612, 8388607
        %v614 = vor.u32 %v613, 8388608
        %v615 = vsub.s32 0, %v614
        %v616 = vadd.s32 %v611, 1
        %vm617 = vcmp.gt.s32.totalorder %v616, 0
        %v618 = vsel %vm617, %v616, 0
        %v619 = vshrl.u32 %v618, 5
        %v620 = vand.u32 %v618, 31
        %v621 = vsub.s32 32, %v620
        %v622 = vshrl.u32 683565275, %v621
        %v623 = vshll.u32 683565275, %v620
        %v624 = vshrl.u32 2475754826, %v621
        %v625 = vor.u32 %v623, %v624
        %v626 = vshll.u32 2475754826, %v620
        %v627 = vshrl.u32 2131351028, %v621
        %v628 = vor.u32 %v626, %v627
        %v629 = vshll.u32 2131351028, %v620
        %v630 = vshrl.u32 2102212464, %v621
        %v631 = vor.u32 %v629, %v630
        %v632 = vshll.u32 2102212464, %v620
        %v633 = vshrl.u32 920167782, %v621
        %v634 = vor.u32 %v632, %v633
        %v635 = vshll.u32 920167782, %v620
        %v636 = vshrl.u32 1326507024, %v621
        %v637 = vor.u32 %v635, %v636
        %vm638 = vcmp.lt.s32.totalorder %v619, 1
        %vm639 = vcmp.lt.s32.totalorder %v619, 2
        %vm640 = vcmp.lt.s32.totalorder %v619, 3
        %vm641 = vcmp.lt.s32.totalorder %v619, 4
        %v642 = vsel %vm638, %v622, %v625
        %v643 = vsel %vm641, %v631, 2102212464
        %v644 = vsel %vm640, %v628, %v643
        %v645 = vsel %vm639, %v642, %v644
        %v646 = vsel %vm638, %v625, %v628
        %v647 = vsel %vm641, %v634, 920167782
        %v648 = vsel %vm640, %v631, %v647
        %v649 = vsel %vm639, %v646, %v648
        %v650 = vsel %vm638, %v628, %v631
        %v651 = vsel %vm641, %v637, 1326507024
        %v652 = vsel %vm640, %v634, %v651
        %v653 = vsel %vm639, %v650, %v652
        %v654 = vshll.u32 %v614, 8
        %v655 = vmul.u32.u64.compose %v654, %v653
        %v656 = vextract.low.u32 %v655
        %v657 = vextract.high.u32 %v655
        %v658 = vmul.u32.u64.compose %v654, %v649
        %v659 = vextract.low.u32 %v658
        %v660 = vextract.high.u32 %v658
        %v661 = vmul.u32 %v654, %v645
        %v662 = vadd.s32 %v657, %v659
        %vm663 = vc.u32 %v657, %v659
        %v664 = vadd.s32 %v660, 1
        %v665 = vsel %vm663, %v664, %v660
        %v666 = vadd.s32 %v661, %v665
        %v667 = vadd.s32 %v666, 536870912
        %v668 = vshrl.u32 %v667, 30
        %v669 = vshll.u32 %v668, 30
        %v670 = vsub.s32 %v666, %v669
        %vm671 = vcmp.lt.s32.totalorder %v670, 0
        %v672 = vsub.s32 0, %v670
        %v673 = vsel %vm671, %v672, %v670
        %v674 = vclz %v673
        %v675 = vsub.s32 %v674, 2
        %vm676 = vcmp.gt.s32.totalorder 0, %v675
        %v677 = vsel %vm676, 0, %v675
        %v678 = vsub.s32 32, %v677
        %v679 = vshll.u32 %v670, %v677
        %v680 = vshrl.u32 %v662, %v678
        %v681 = vor.u32 %v679, %v680
        %v682 = vsub.s32 4294967266, %v677
        %v683 = vadd.s32 %v682, 127
        %v684 = vshll.u32 %v683, 23
        %v685 = vor.u32 4788187, %v684
        %v686 = vand.u32 2147483647, %v685
        %v688 = vcvt.s32.f32 %v681
        %v689 = vmul.f32 %v688, %v686
        %v690 = vxor.u32 %v689, 2147483648
        %v691 = vsel %vm608, %v690, %v689
        %v692 = vsub.s32 4, %v668
        %v693 = vsel %vm608, %v692, %v668
        %v694 = vsel %vm607, %v502, %v691
        %v695 = vsel %vm607, 0, %v693
        %v696 = vcosq.f32.pop %v694
        %v697 = vsinq.f32.pop %v694
        %vm698 = vweird.f32 %v502
        %v699 = vand.u32 %v695, 3
        %vm700 = vcmp.lt.s32.totalorder %v699, 2
        %vm701 = vcmp.eq.s32.totalorder %v699, 0
        %v702 = vxor.u32 %v697, 2147483648
        %v703 = vsel %vm701, %v696, %v702
        %vm704 = vcmp.eq.s32.totalorder %v699, 2
        %v705 = vxor.u32 %v696, 2147483648
        %v706 = vsel %vm704, %v705, %v697
        %v707 = vsel %vm700, %v703, %v706
        %v708 = vsel %vm698, nan, %v707
        %v709 = vsub.f32 1.0, %v605
        %v710 = vsub.f32 1.0, %v708
        %v713 = vrot.slane %v710, 7
        %v714 = vsel %vm484, %v713, %v709
        %v716 = vsel %vm380, %v714, 0.0
        %717 = vadd.xlane.f32.xlu0 %v716
        %v718 = vpop.xlane.xlu0 %717
        %v719 = vrot.slane %v718, 4
        %v720 = vadd.f32 %v718, %v719
        %v721 = vrot.slane %v720, 2
        %v722 = vadd.f32 %v720, %v721
        %v723 = vrot.slane %v722, 1
        %v724 = vadd.f32 %v722, %v723
        %s725 = vtos %v724
        %v726 = vlaneseq
        %v727 = vand.u32 %v726, 127
        %vm728 = vcmp.eq.s32.totalorder %v727, 0
        %v729 = vstv %s390
        %v730 = vsel %vm728, %v729, 0.0
        %vm731 = vcmp.eq.s32.totalorder %v727, 1
        %v732 = vstv %s401
        %v733 = vsel %vm731, %v732, 0.0
        %v734 = vadd.f32 %v730, %v733
        %vm735 = vcmp.eq.s32.totalorder %v727, 2
        %v736 = vstv %s412
        %v737 = vsel %vm735, %v736, 0.0
        %v738 = vadd.f32 %v734, %v737
        %vm739 = vcmp.eq.s32.totalorder %v727, 3
        %v740 = vstv %s496
        %v741 = vsel %vm739, %v740, 0.0
        %v742 = vadd.f32 %v738, %v741
        %vm743 = vcmp.eq.s32.totalorder %v727, 4
        %v744 = vstv %s725
        %v745 = vsel %vm743, %v744, 0.0
        %v746 = vadd.f32 %v742, %v745
        %747 = vst [vmem:[%s357] sm:$0xff] %v746
        %s748 = sand.u32 %s157, 1
        %s749 = scalar_lea.sflag [#allocation5], %s748
        %s750 = sand.u32 %s157, 1
        %s751 = smul.addr %s750, 8
        %s752 = scalar_lea.vmem [#allocation4], %s751
        // Predicated region
        $region117: #{tpu_custom_call.1} parent=107 // pred_check
          %p753 = pneg %p167
        $region118: #{tpu_custom_call.1} parent=107 // pred_check_branch
          %755 = sbr.rel (%p753) target = $region120
        $region119: #{tpu_custom_call.1} parent=107 // pred_region
          %s757 = ssub.s32 128, 128
          %758 = vsyncadd %s749, %s757
          %s759 = smul.addr %s19, 128
          %s760 = scalar_lea.hbm %s5, %s759
          %s762 = sshll.u32 %s752, 4
          %s763 = int_to_ptr.vmem [resolvable:$true] %s762
          %765 = dma.vmem_to_hbm [thread:$0]  %s763, 128, %s760, %s749
        $region120: #{tpu_custom_call.1} parent=107 // pred_fallthru
          _
      $region108: #{tpu_custom_call.1} parent=5 // pred_fallthru
        _
      %p766 = scmp.le.s32.totalorder 2, %s14
      // Predicated region
      $region121: #{tpu_custom_call.1} parent=5 // pred_check
        %p767 = pneg %p766
      $region122: #{tpu_custom_call.1} parent=5 // pred_check_branch
        %769 = sbr.rel (%p767) target = $region124
      $region123: #{tpu_custom_call.1} parent=5 // pred_region
        %s770 = ssub.s32 %s14, 2
        // Predicated region
        $region125: #{tpu_custom_call.1} parent=123 // pred_check
          %p771 = pneg %p173
        $region126: #{tpu_custom_call.1} parent=123 // pred_check_branch
          %773 = sbr.rel (%p771) target = $region128
        $region127: #{tpu_custom_call.1} parent=123 // pred_region
          %s774 = sand.u32 %s158, 1
          %s775 = scalar_lea.sflag [#allocation5], %s774
          %s776 = sand.u32 %s158, 1
          %s777 = smul.addr %s776, 8
          %s778 = scalar_lea.vmem [#allocation4], %s777
          %779 = dma.done %s775, 128
        $region128: #{tpu_custom_call.1} parent=123 // pred_fallthru
          _
      $region124: #{tpu_custom_call.1} parent=5 // pred_fallthru
        _
    $region6: #{tpu_custom_call.1} parent=1 // loop_footer
      %s18 = sadd.s32 1, %s14
    $region7: #{tpu_custom_call.1} parent=1 // loop_footer_branch
      %13 = sbr.rel target = $region3
    $region8: #{tpu_custom_call.1} parent=1 // loop_exit
      _
    %780 = vsyncpa [#allocation5], 1
    %s781 = scalar_lea.sflag [#allocation5], 1
    %782 = vsyncpa %s781, 1

</llo_original>
